<compile_context>
chip_gen: v7x
topology: tpu7x:2x2x1
jax: 0.10.0
libtpu: 0.0.40
codegen_flags: <defaults>
</compile_context>

<pallas_src>
import jax
import jax.numpy as jnp
from jax.experimental import pallas as pl
from jax.experimental.pallas import tpu as pltpu

EPS = 1e-6


def anfis_kernel(x_ref, c_ref, ninv_ref, mask_ref, wgt_ref, bias_ref, sel_ref,
                 out_ref):
    x = x_ref[...]                                    # (TB, I)
    c = c_ref[...]                                    # (I, Rp)
    neg_inv = ninv_ref[...]                           # (I, Rp) = -1/(2*sigma^2+eps)

    # --- Gaussian membership + log-domain product over inputs ----------------
    diff = x[:, :, None] - c[None, :, :]              # (TB, I, Rp)
    mu = jnp.exp((diff * diff) * neg_inv[None, :, :]) # multiply, no divide
    alpha = jnp.sum(jnp.log(mu + EPS), axis=1)        # (TB, Rp)

    # --- mask padded rules (additive constant row), softmax over rules -------
    alpha = alpha + mask_ref[...]                     # (1, Rp): 0 real, -1e30 padded
    a_max = jnp.max(alpha, axis=1, keepdims=True)
    e = jnp.exp(alpha - a_max)
    s_inv = 1.0 / jnp.sum(e, axis=1, keepdims=True)   # divides only on (TB, 1)
    w = e * s_inv                                     # (TB, Rp), 0 on padded rules

    # --- Consequent (TSK) layer: one fused matmul, bias split off ------------
    f = jnp.dot(x, wgt_ref[...],
                preferred_element_type=jnp.float32) + bias_ref[...]   # (TB, O*Rp)
    n_rep = wgt_ref.shape[1] // c_ref.shape[1]        # = O (static)
    wt = jnp.concatenate([w] * n_rep, axis=1)         # (TB, O*Rp) lane-aligned copies

    # per-output lane-block reduce on the MXU via block-diagonal ones selector
    out = jnp.dot(wt * f, sel_ref[...],
                  preferred_element_type=jnp.float32)                 # (TB, O)
    out_ref[...] = out.astype(out_ref.dtype)


def _pick_defaults():
    """Per-generation tile size / scoped-VMEM defaults."""
    try:
        kind = jax.devices()[0].device_kind.lower()
    except Exception:
        return 256, None
    if "v7" in kind:
        return 256, None                      # 64 MiB VMEM/TC: keep default scoped limit
    return 512, 64 * 1024 * 1024              # v5e/v6e: bigger tiles, raised scoped limit


def anfis_forward(x, c, sigma, cons, *, block_b=None, vmem_limit_bytes=None):
    """x: (B, I); c,sigma: (I, R); cons: (R, I+1, O)  ->  (B, O)."""
    B, I = x.shape
    R = c.shape[1]
    O = cons.shape[2]
    Rp = ((R + 127) // 128) * 128                     # pad rules to full lanes
    dt = x.dtype

    if block_b is None:
        block_b, auto_vmem = _pick_defaults()
        if vmem_limit_bytes is None:
            vmem_limit_bytes = auto_vmem

    # --- parameter preprocessing (plain JAX glue, grid-invariant) ------------
    c_p = jnp.zeros((I, Rp), dt).at[:, :R].set(c)
    ninv = (-1.0 / (2.0 * sigma.astype(jnp.float32) ** 2 + EPS)).astype(dt)
    ninv_p = jnp.full((I, Rp), -0.5, dt).at[:, :R].set(ninv)     # pad value irrelevant
    mask = jnp.where(jnp.arange(Rp) < R, 0.0, -1e30).astype(dt).reshape(1, Rp)

    # cons (R, I+1, O): row 0 of axis 1 multiplies the ones-column -> bias.
    w_t = jnp.transpose(cons[:, 1:, :], (1, 2, 0))    # (I, O, R)
    wgt = jnp.zeros((I, O, Rp), dt).at[:, :, :R].set(w_t).reshape(I, O * Rp)
    b_t = jnp.transpose(cons[:, 0, :], (1, 0))        # (O, R)
    bias = jnp.zeros((1, O, Rp), dt).at[0, :, :R].set(b_t).reshape(1, O * Rp)

    # block-diagonal ones: sel[o*Rp + r, o] = 1  (per-output lane-block sum)
    sel = jnp.kron(jnp.eye(O, dtype=dt), jnp.ones((Rp, 1), dt))  # (O*Rp, O)

    # --- batch tiling: tb multiple of 8, prefer >=2 grid steps (v7x megacore)
    target_steps = 2 if B > 8 else 1
    tb = min(block_b, (B + target_steps - 1) // target_steps)
    tb = max(8, ((tb + 7) // 8) * 8)
    B_pad = ((B + tb - 1) // tb) * tb
    x_p = x if B_pad == B else jnp.zeros((B_pad, I), dt).at[:B].set(x)

    cp_kwargs = dict(dimension_semantics=("parallel",))
    if vmem_limit_bytes is not None:
        cp_kwargs["vmem_limit_bytes"] = vmem_limit_bytes

    out = pl.pallas_call(
        anfis_kernel,
        out_shape=jax.ShapeDtypeStruct((B_pad, O), dt),
        grid=(B_pad // tb,),
        in_specs=[
            pl.BlockSpec((tb, I), lambda b: (b, 0)),        # x tile
            pl.BlockSpec((I, Rp), lambda b: (0, 0)),        # centers (resident)
            pl.BlockSpec((I, Rp), lambda b: (0, 0)),        # -1/(2*sigma^2+eps)
            pl.BlockSpec((1, Rp), lambda b: (0, 0)),        # padded-rule mask row
            pl.BlockSpec((I, O * Rp), lambda b: (0, 0)),    # consequent weights
            pl.BlockSpec((1, O * Rp), lambda b: (0, 0)),    # consequent bias
            pl.BlockSpec((O * Rp, O), lambda b: (0, 0)),    # per-output selector
        ],
        out_specs=pl.BlockSpec((tb, O), lambda b: (b, 0)),
        compiler_params=pltpu.CompilerParams(**cp_kwargs),
    )(x_p, c_p, ninv_p, mask, wgt, bias, sel)
    return out[:B]


def anfis_ref(x, c, sigma, cons):
    """Pure-JAX reference matching the PyTorch module."""
    mu = jnp.exp(-(x[:, :, None] - c) ** 2 / (2.0 * sigma ** 2 + EPS))
    alpha = jnp.sum(jnp.log(mu + EPS), axis=1)
    w = jax.nn.softmax(alpha, axis=1)
    x1 = jnp.concatenate([jnp.ones((x.shape[0], 1), x.dtype), x], axis=1)
    f = jnp.einsum('bi,mio->bmo', x1, cons)
    return jnp.sum(w[:, :, None] * f, axis=1)


if __name__ == "__main__":
    B, INPUT_SIZE, N_RULES, N_OUT = 8, 16, 16, 3

    key = jax.random.PRNGKey(0)
    kx, kc, kcons = jax.random.split(key, 3)

    x = jax.random.normal(kx, (B, INPUT_SIZE), dtype=jnp.float32)
    c = jax.random.normal(kc, (INPUT_SIZE, N_RULES), dtype=jnp.float32)
    sigma = jnp.ones((INPUT_SIZE, N_RULES), dtype=jnp.float32)
    cons = jax.random.normal(kcons, (N_RULES, INPUT_SIZE + 1, N_OUT),
                             dtype=jnp.float32)

    out = jax.block_until_ready(anfis_forward(x, c, sigma, cons))
    ref = anfis_ref(x, c, sigma, cons)
    assert out.shape == (B, N_OUT)
    assert jnp.allclose(out, ref, rtol=1e-5, atol=1e-5), (out, ref)

    print("KERNEL_OK")
</pallas_src>

<mosaic_0001>
module attributes {stable_mosaic.version = 11 : i64} {
  func.func @anfis_kernel(%arg0: i32, %arg1: memref<8x16xf32, #tpu.memory_space<vmem>>, %arg2: memref<16x128xf32, #tpu.memory_space<vmem>>, %arg3: memref<16x128xf32, #tpu.memory_space<vmem>>, %arg4: memref<1x128xf32, #tpu.memory_space<vmem>>, %arg5: memref<16x384xf32, #tpu.memory_space<vmem>>, %arg6: memref<1x384xf32, #tpu.memory_space<vmem>>, %arg7: memref<384x3xf32, #tpu.memory_space<vmem>>, %arg8: memref<8x3xf32, #tpu.memory_space<vmem>>) attributes {dimension_semantics = [#tpu.dimension_semantics<parallel>], iteration_bounds = array<i64: 1>, scalar_prefetch = 0 : i64, scratch_operands = 0 : i64, tpu.core_type = #tpu.core_type<tc>, window_params = [{transform_indices = @transform_0, window_bounds = array<i64: 8, 16>}, {pipeline_mode = #tpu.pipeline_mode<synchronous>, transform_indices = @transform_1, window_bounds = array<i64: 16, 128>}, {pipeline_mode = #tpu.pipeline_mode<synchronous>, transform_indices = @transform_2, window_bounds = array<i64: 16, 128>}, {pipeline_mode = #tpu.pipeline_mode<synchronous>, transform_indices = @transform_3, window_bounds = array<i64: 1, 128>}, {pipeline_mode = #tpu.pipeline_mode<synchronous>, transform_indices = @transform_4, window_bounds = array<i64: 16, 384>}, {pipeline_mode = #tpu.pipeline_mode<synchronous>, transform_indices = @transform_5, window_bounds = array<i64: 1, 384>}, {pipeline_mode = #tpu.pipeline_mode<synchronous>, transform_indices = @transform_6, window_bounds = array<i64: 384, 3>}, {transform_indices = @transform_7, window_bounds = array<i64: 8, 3>}]} {
    %c0 = arith.constant 0 : index
    %c0_0 = arith.constant 0 : index
    %0 = vector.load %arg1[%c0, %c0_0] : memref<8x16xf32, #tpu.memory_space<vmem>>, vector<8x16xf32>
    %c0_1 = arith.constant 0 : index
    %c0_2 = arith.constant 0 : index
    %1 = vector.load %arg2[%c0_1, %c0_2] : memref<16x128xf32, #tpu.memory_space<vmem>>, vector<16x128xf32>
    %c0_3 = arith.constant 0 : index
    %c0_4 = arith.constant 0 : index
    %2 = vector.load %arg3[%c0_3, %c0_4] : memref<16x128xf32, #tpu.memory_space<vmem>>, vector<16x128xf32>
    %3 = vector.shape_cast %0 : vector<8x16xf32> to vector<8x16x1xf32>
    %4 = vector.shape_cast %1 : vector<16x128xf32> to vector<1x16x128xf32>
    %5 = vector.broadcast %3 : vector<8x16x1xf32> to vector<8x16x128xf32>
    %6 = vector.broadcast %4 : vector<1x16x128xf32> to vector<8x16x128xf32>
    %7 = arith.subf %5, %6 : vector<8x16x128xf32>
    %8 = arith.mulf %7, %7 : vector<8x16x128xf32>
    %9 = vector.shape_cast %2 : vector<16x128xf32> to vector<1x16x128xf32>
    %10 = vector.broadcast %9 : vector<1x16x128xf32> to vector<8x16x128xf32>
    %11 = arith.mulf %8, %10 : vector<8x16x128xf32>
    %12 = math.exp %11 : vector<8x16x128xf32>
    %cst = arith.constant 9.99999997E-7 : f32
    %13 = vector.broadcast %cst : f32 to vector<8x16x128xf32>
    %14 = arith.addf %12, %13 : vector<8x16x128xf32>
    %15 = math.log %14 : vector<8x16x128xf32>
    %cst_5 = arith.constant dense<0.000000e+00> : vector<8x128xf32>
    %16 = vector.multi_reduction <add>, %15, %cst_5 [1] : vector<8x16x128xf32> to vector<8x128xf32>
    %c0_6 = arith.constant 0 : index
    %c0_7 = arith.constant 0 : index
    %17 = vector.load %arg4[%c0_6, %c0_7] : memref<1x128xf32, #tpu.memory_space<vmem>>, vector<1x128xf32>
    %18 = vector.broadcast %17 : vector<1x128xf32> to vector<8x128xf32>
    %19 = arith.addf %16, %18 : vector<8x128xf32>
    %cst_8 = arith.constant dense<0xFF800000> : vector<8xf32>
    %20 = vector.multi_reduction <maximumf>, %19, %cst_8 [1] : vector<8x128xf32> to vector<8xf32>
    %21 = vector.shape_cast %20 : vector<8xf32> to vector<8x1xf32>
    %22 = vector.broadcast %21 : vector<8x1xf32> to vector<8x128xf32>
    %23 = arith.subf %19, %22 : vector<8x128xf32>
    %24 = math.exp %23 : vector<8x128xf32>
    %cst_9 = arith.constant dense<0.000000e+00> : vector<8xf32>
    %25 = vector.multi_reduction <add>, %24, %cst_9 [1] : vector<8x128xf32> to vector<8xf32>
    %26 = vector.shape_cast %25 : vector<8xf32> to vector<8x1xf32>
    %cst_10 = arith.constant 1.000000e+00 : f32
    %27 = vector.broadcast %cst_10 : f32 to vector<8x1xf32>
    %28 = arith.divf %27, %26 : vector<8x1xf32>
    %29 = vector.broadcast %28 : vector<8x1xf32> to vector<8x128xf32>
    %30 = arith.mulf %24, %29 : vector<8x128xf32>
    %c0_11 = arith.constant 0 : index
    %c0_12 = arith.constant 0 : index
    %31 = vector.load %arg5[%c0_11, %c0_12] : memref<16x384xf32, #tpu.memory_space<vmem>>, vector<16x384xf32>
    %cst_13 = arith.constant dense<0.000000e+00> : vector<8x384xf32>
    %32 = tpu.matmul %0, %31, %cst_13 {dimension_numbers = #tpu.dot_dimension_numbers<[1], [0], [0], [1], [0, 0, 1, 1], [], []>} : vector<8x16xf32>, vector<16x384xf32>, vector<8x384xf32> -> vector<8x384xf32>
    %c0_14 = arith.constant 0 : index
    %c0_15 = arith.constant 0 : index
    %33 = vector.load %arg6[%c0_14, %c0_15] : memref<1x384xf32, #tpu.memory_space<vmem>>, vector<1x384xf32>
    %34 = vector.broadcast %33 : vector<1x384xf32> to vector<8x384xf32>
    %35 = arith.addf %32, %34 : vector<8x384xf32>
    %36 = tpu.concatenate %30, %30, %30 in 1 : vector<8x128xf32>, vector<8x128xf32>, vector<8x128xf32> -> vector<8x384xf32>
    %37 = arith.mulf %36, %35 : vector<8x384xf32>
    %c0_16 = arith.constant 0 : index
    %c0_17 = arith.constant 0 : index
    %38 = vector.load %arg7[%c0_16, %c0_17] : memref<384x3xf32, #tpu.memory_space<vmem>>, vector<384x3xf32>
    %cst_18 = arith.constant dense<0.000000e+00> : vector<8x3xf32>
    %39 = tpu.matmul %37, %38, %cst_18 {dimension_numbers = #tpu.dot_dimension_numbers<[1], [0], [0], [1], [0, 0, 1, 1], [], []>} : vector<8x384xf32>, vector<384x3xf32>, vector<8x3xf32> -> vector<8x3xf32>
    %c0_19 = arith.constant 0 : index
    %c0_20 = arith.constant 0 : index
    %40 = vector.load %arg8[%c0_19, %c0_20] : memref<8x3xf32, #tpu.memory_space<vmem>>, vector<8x3xf32>
    tpu.vector_store %arg8[%c0_19, %c0_20], %39 {strides = array<i32>} : memref<8x3xf32, #tpu.memory_space<vmem>>, vector<8x3xf32>,
    return
  }
  func.func @transform_0(%arg0: i32) -> (i32, i32) {
    %c0_i32 = arith.constant 0 : i32
    %c0_i32_0 = arith.constant 0 : i32
    return %arg0, %c0_i32 : i32, i32
  }
  func.func @transform_1(%arg0: i32) -> (i32, i32) {
    %c0_i32 = arith.constant 0 : i32
    %c0_i32_0 = arith.constant 0 : i32
    %c0_i32_1 = arith.constant 0 : i32
    return %c0_i32, %c0_i32_0 : i32, i32
  }
  func.func @transform_2(%arg0: i32) -> (i32, i32) {
    %c0_i32 = arith.constant 0 : i32
    %c0_i32_0 = arith.constant 0 : i32
    %c0_i32_1 = arith.constant 0 : i32
    return %c0_i32, %c0_i32_0 : i32, i32
  }
  func.func @transform_3(%arg0: i32) -> (i32, i32) {
    %c0_i32 = arith.constant 0 : i32
    %c0_i32_0 = arith.constant 0 : i32
    %c0_i32_1 = arith.constant 0 : i32
    return %c0_i32, %c0_i32_0 : i32, i32
  }
  func.func @transform_4(%arg0: i32) -> (i32, i32) {
    %c0_i32 = arith.constant 0 : i32
    %c0_i32_0 = arith.constant 0 : i32
    %c0_i32_1 = arith.constant 0 : i32
    return %c0_i32, %c0_i32_0 : i32, i32
  }
  func.func @transform_5(%arg0: i32) -> (i32, i32) {
    %c0_i32 = arith.constant 0 : i32
    %c0_i32_0 = arith.constant 0 : i32
    %c0_i32_1 = arith.constant 0 : i32
    return %c0_i32, %c0_i32_0 : i32, i32
  }
  func.func @transform_6(%arg0: i32) -> (i32, i32) {
    %c0_i32 = arith.constant 0 : i32
    %c0_i32_0 = arith.constant 0 : i32
    %c0_i32_1 = arith.constant 0 : i32
    return %c0_i32, %c0_i32_0 : i32, i32
  }
  func.func @transform_7(%arg0: i32) -> (i32, i32) {
    %c0_i32 = arith.constant 0 : i32
    %c0_i32_0 = arith.constant 0 : i32
    return %arg0, %c0_i32 : i32, i32
  }
}

</mosaic_0001>

<llo_original>
// kernel: tpu_custom_call.1
$region0: #{tpu_custom_call.1}
  #allocation0 [shape = 'u32[]', space=smem, size = 0x4, offset = 0x4, fixed_abs, tag = 'smem constant byte address 0x4 - core index']
  #allocation1 [shape = 'u32[144,128]{1,0:T(1,128)}', space=vmem, size = 0x12000, scoped, tag = 'internal scratch']
  %s0 = inlined_call_operand.hbm [shape: f32[8,16], index: 0, kind: input, shape index: {}]
  %s1 = inlined_call_operand.hbm [shape: f32[16,128], index: 1, kind: input, shape index: {}]
  %s2 = inlined_call_operand.hbm [shape: f32[16,128], index: 2, kind: input, shape index: {}]
  %s3 = inlined_call_operand.hbm [shape: f32[1,128], index: 3, kind: input, shape index: {}]
  %s4 = inlined_call_operand.hbm [shape: f32[16,384], index: 4, kind: input, shape index: {}]
  %s5 = inlined_call_operand.hbm [shape: f32[1,384], index: 5, kind: input, shape index: {}]
  %s6 = inlined_call_operand.hbm [shape: f32[384,3], index: 6, kind: input, shape index: {}]
  %s7 = inlined_call_operand.hbm [shape: f32[8,3], index: 7, kind: output, shape index: {}]
  %s8 = sld [smem:[#allocation0]]
  $region66: #{tpu_custom_call.1} parent=0
    _
  %s10 = ssub.s32 1, %s8
  %s11 = scalar_select 0, %s10, %s8
  $region1: #{tpu_custom_call.1} parent=0
    #allocation2 [shape = 'u8[4096]{0}', space=vmem, size = 0x1000, scoped, tag = 'input window, operand 0, single buffered']
    #allocation3 [shape = 's32[1]{0}', space=sflag, size = 0x4, scoped, tag = 'scoped memory for tpu_custom_call.1']
    #allocation4 [shape = 's32[1]{0}', space=sflag, size = 0x4, scoped, tag = 'scoped memory for tpu_custom_call.1']
    #allocation5 [shape = 'u8[8192]{0}', space=vmem, size = 0x2000, scoped, tag = 'input window, operand 1, single buffered']
    #allocation6 [shape = 's32[1]{0}', space=sflag, size = 0x4, scoped, tag = 'scoped memory for tpu_custom_call.1']
    #allocation7 [shape = 'u8[8192]{0}', space=vmem, size = 0x2000, scoped, tag = 'input window, operand 2, single buffered']
    #allocation8 [shape = 'u8[512]{0}', space=vmem, size = 0x400, scoped, tag = 'input window, operand 3, single buffered']
    #allocation9 [shape = 's32[1]{0}', space=sflag, size = 0x4, scoped, tag = 'scoped memory for tpu_custom_call.1']
    #allocation10 [shape = 'u8[24576]{0}', space=vmem, size = 0x6000, scoped, tag = 'input window, operand 4, single buffered']
    #allocation11 [shape = 'u8[1536]{0}', space=vmem, size = 0x800, scoped, tag = 'input window, operand 5, single buffered']
    #allocation12 [shape = 's32[1]{0}', space=sflag, size = 0x4, scoped, tag = 'scoped memory for tpu_custom_call.1']
    #allocation13 [shape = 'u8[196608]{0}', space=vmem, size = 0x30000, scoped, tag = 'input window, operand 6, single buffered']
    #allocation14 [shape = 'u8[4096]{0}', space=vmem, size = 0x1000, scoped, tag = 'output window, operand 0, single buffered']
    %12 = vsyncpa [#allocation3], 0
    %13 = vsyncpa [#allocation6], 0
    %14 = vsyncpa [#allocation9], 0
    %15 = vsyncpa [#allocation12], 0
    %16 = vsyncpa [#allocation4], 0
    // Predicated region
    $region2: #{tpu_custom_call.1} parent=1 // pred_check
      _
    $region3: #{tpu_custom_call.1} parent=1 // pred_check_branch
      %18 = sbr.rel (0) target = $region5
    $region4: #{tpu_custom_call.1} parent=1 // pred_region
      %s20 = ssub.s32 128, 128
      %21 = vsyncadd [#allocation3], %s20
      %s23 = sshll.u32 [#allocation2], 4
      %s24 = int_to_ptr.vmem [resolvable:$true] %s23
      %26 = dma.hbm_to_vmem [thread:$0]  %s0, 128, %s24, [#allocation3]
    $region5: #{tpu_custom_call.1} parent=1 // pred_fallthru
      _
    // Predicated region
    $region6: #{tpu_custom_call.1} parent=1 // pred_check
      _
    $region7: #{tpu_custom_call.1} parent=1 // pred_check_branch
      %28 = sbr.rel (0) target = $region9
    $region8: #{tpu_custom_call.1} parent=1 // pred_region
      %s30 = ssub.s32 256, 256
      %31 = vsyncadd [#allocation6], %s30
      %s32 = sshll.u32 [#allocation5], 4
      %s33 = int_to_ptr.vmem [resolvable:$true] %s32
      %38 = dma.hbm_to_vmem [thread:$0]  %s1, 256, %s33, [#allocation6], 128, 128, 8
    $region9: #{tpu_custom_call.1} parent=1 // pred_fallthru
      _
    // Predicated region
    $region10: #{tpu_custom_call.1} parent=1 // pred_check
      _
    $region11: #{tpu_custom_call.1} parent=1 // pred_check_branch
      %40 = sbr.rel (0) target = $region13
    $region12: #{tpu_custom_call.1} parent=1 // pred_region
      %s42 = ssub.s32 256, 256
      %43 = vsyncadd [#allocation6], %s42
      %s44 = sshll.u32 [#allocation7], 4
      %s45 = int_to_ptr.vmem [resolvable:$true] %s44
      %50 = dma.hbm_to_vmem [thread:$0]  %s2, 256, %s45, [#allocation6], 128, 128, 8
    $region13: #{tpu_custom_call.1} parent=1 // pred_fallthru
      _
    // Predicated region
    $region14: #{tpu_custom_call.1} parent=1 // pred_check
      _
    $region15: #{tpu_custom_call.1} parent=1 // pred_check_branch
      %52 = sbr.rel (0) target = $region17
    $region16: #{tpu_custom_call.1} parent=1 // pred_region
      %s54 = ssub.s32 16, 16
      %55 = vsyncadd [#allocation9], %s54
      %s57 = sshll.u32 [#allocation8], 4
      %s58 = int_to_ptr.vmem [resolvable:$true] %s57
      %60 = dma.hbm_to_vmem [thread:$0]  %s3, 16, %s58, [#allocation9]
    $region17: #{tpu_custom_call.1} parent=1 // pred_fallthru
      _
    // Predicated region
    $region18: #{tpu_custom_call.1} parent=1 // pred_check
      _
    $region19: #{tpu_custom_call.1} parent=1 // pred_check_branch
      %62 = sbr.rel (0) target = $region21
    $region20: #{tpu_custom_call.1} parent=1 // pred_region
      %s64 = ssub.s32 768, 768
      %65 = vsyncadd [#allocation9], %s64
      %s66 = sshll.u32 [#allocation10], 4
      %s67 = int_to_ptr.vmem [resolvable:$true] %s66
      %72 = dma.hbm_to_vmem [thread:$0]  %s4, 768, %s67, [#allocation9], 384, 384, 24
    $region21: #{tpu_custom_call.1} parent=1 // pred_fallthru
      _
    // Predicated region
    $region22: #{tpu_custom_call.1} parent=1 // pred_check
      _
    $region23: #{tpu_custom_call.1} parent=1 // pred_check_branch
      %74 = sbr.rel (0) target = $region25
    $region24: #{tpu_custom_call.1} parent=1 // pred_region
      %s76 = ssub.s32 48, 48
      %77 = vsyncadd [#allocation12], %s76
      %s79 = sshll.u32 [#allocation11], 4
      %s80 = int_to_ptr.vmem [resolvable:$true] %s79
      %82 = dma.hbm_to_vmem [thread:$0]  %s5, 48, %s80, [#allocation12]
    $region25: #{tpu_custom_call.1} parent=1 // pred_fallthru
      _
    // Predicated region
    $region26: #{tpu_custom_call.1} parent=1 // pred_check
      _
    $region27: #{tpu_custom_call.1} parent=1 // pred_check_branch
      %84 = sbr.rel (0) target = $region29
    $region28: #{tpu_custom_call.1} parent=1 // pred_region
      %s86 = ssub.s32 6144, 6144
      %87 = vsyncadd [#allocation12], %s86
      %s88 = sshll.u32 [#allocation13], 4
      %s89 = int_to_ptr.vmem [resolvable:$true] %s88
      %94 = dma.hbm_to_vmem [thread:$0]  %s6, 6144, %s89, [#allocation12], 128, 128, 8
    $region29: #{tpu_custom_call.1} parent=1 // pred_fallthru
      _
    // Predicated region
    $region30: #{tpu_custom_call.1} parent=1 // pred_check
      _
    $region31: #{tpu_custom_call.1} parent=1 // pred_check_branch
      %96 = sbr.rel (0) target = $region33
    $region32: #{tpu_custom_call.1} parent=1 // pred_region
      %97 = dma.done [#allocation3], 128
    $region33: #{tpu_custom_call.1} parent=1 // pred_fallthru
      _
    // Predicated region
    $region34: #{tpu_custom_call.1} parent=1 // pred_check
      _
    $region35: #{tpu_custom_call.1} parent=1 // pred_check_branch
      %99 = sbr.rel (0) target = $region37
    $region36: #{tpu_custom_call.1} parent=1 // pred_region
      %100 = dma.done [#allocation6], 256
    $region37: #{tpu_custom_call.1} parent=1 // pred_fallthru
      _
    // Predicated region
    $region38: #{tpu_custom_call.1} parent=1 // pred_check
      _
    $region39: #{tpu_custom_call.1} parent=1 // pred_check_branch
      %102 = sbr.rel (0) target = $region41
    $region40: #{tpu_custom_call.1} parent=1 // pred_region
      %103 = dma.done [#allocation6], 256
    $region41: #{tpu_custom_call.1} parent=1 // pred_fallthru
      _
    // Predicated region
    $region42: #{tpu_custom_call.1} parent=1 // pred_check
      _
    $region43: #{tpu_custom_call.1} parent=1 // pred_check_branch
      %105 = sbr.rel (0) target = $region45
    $region44: #{tpu_custom_call.1} parent=1 // pred_region
      %106 = dma.done [#allocation9], 16
    $region45: #{tpu_custom_call.1} parent=1 // pred_fallthru
      _
    // Predicated region
    $region46: #{tpu_custom_call.1} parent=1 // pred_check
      _
    $region47: #{tpu_custom_call.1} parent=1 // pred_check_branch
      %108 = sbr.rel (0) target = $region49
    $region48: #{tpu_custom_call.1} parent=1 // pred_region
      %109 = dma.done [#allocation9], 768
    $region49: #{tpu_custom_call.1} parent=1 // pred_fallthru
      _
    // Predicated region
    $region50: #{tpu_custom_call.1} parent=1 // pred_check
      _
    $region51: #{tpu_custom_call.1} parent=1 // pred_check_branch
      %111 = sbr.rel (0) target = $region53
    $region52: #{tpu_custom_call.1} parent=1 // pred_region
      %112 = dma.done [#allocation12], 48
    $region53: #{tpu_custom_call.1} parent=1 // pred_fallthru
      _
    // Predicated region
    $region54: #{tpu_custom_call.1} parent=1 // pred_check
      _
    $region55: #{tpu_custom_call.1} parent=1 // pred_check_branch
      %114 = sbr.rel (0) target = $region57
    $region56: #{tpu_custom_call.1} parent=1 // pred_region
      %115 = dma.done [#allocation12], 6144
    $region57: #{tpu_custom_call.1} parent=1 // pred_fallthru
      _
    %v116 = vld [vmem:[#allocation2] sm:$0xff]
    %v117 = vld [vmem:[#allocation5] sm:$0xff]
    %v118 = vld [vmem:[#allocation5 + $0x8] sm:$0xff]
    %v119 = vld [vmem:[#allocation7] sm:$0xff]
    %v120 = vld [vmem:[#allocation7 + $0x8] sm:$0xff]
    %v121 = vlaneseq
    %v122 = vshrl.u32 %v121, 7
    %v123 = vsub.s32 0, %v122
    %v124 = vrot.slane %v116, %v123
    %126 = vbcast.lane.b32.xlu0 %v124, 256
    %v127 = vpop.permute.xlu0 %126
    %s129 = sor.u32 256, 8
    %130 = vbcast.lane.b32.xlu0 %v124, %s129
    %v131 = vpop.permute.xlu0 %130
    %v132 = vlaneseq
    %v133 = vshrl.u32 %v132, 7
    %v134 = vsub.s32 1, %v133
    %v135 = vrot.slane %v116, %v134
    %137 = vbcast.lane.b32.xlu0 %v135, 256
    %v138 = vpop.permute.xlu0 %137
    %s140 = sor.u32 256, 8
    %141 = vbcast.lane.b32.xlu0 %v135, %s140
    %v142 = vpop.permute.xlu0 %141
    %v143 = vlaneseq
    %v144 = vshrl.u32 %v143, 7
    %v145 = vsub.s32 2, %v144
    %v146 = vrot.slane %v116, %v145
    %148 = vbcast.lane.b32.xlu0 %v146, 256
    %v149 = vpop.permute.xlu0 %148
    %s151 = sor.u32 256, 8
    %152 = vbcast.lane.b32.xlu0 %v146, %s151
    %v153 = vpop.permute.xlu0 %152
    %v154 = vlaneseq
    %v155 = vshrl.u32 %v154, 7
    %v156 = vsub.s32 3, %v155
    %v157 = vrot.slane %v116, %v156
    %159 = vbcast.lane.b32.xlu0 %v157, 256
    %v160 = vpop.permute.xlu0 %159
    %s162 = sor.u32 256, 8
    %163 = vbcast.lane.b32.xlu0 %v157, %s162
    %v164 = vpop.permute.xlu0 %163
    %v165 = vlaneseq
    %v166 = vshrl.u32 %v165, 7
    %v167 = vsub.s32 4, %v166
    %v168 = vrot.slane %v116, %v167
    %170 = vbcast.lane.b32.xlu0 %v168, 256
    %v171 = vpop.permute.xlu0 %170
    %s173 = sor.u32 256, 8
    %174 = vbcast.lane.b32.xlu0 %v168, %s173
    %v175 = vpop.permute.xlu0 %174
    %v176 = vlaneseq
    %v177 = vshrl.u32 %v176, 7
    %v178 = vsub.s32 5, %v177
    %v179 = vrot.slane %v116, %v178
    %181 = vbcast.lane.b32.xlu0 %v179, 256
    %v182 = vpop.permute.xlu0 %181
    %s184 = sor.u32 256, 8
    %185 = vbcast.lane.b32.xlu0 %v179, %s184
    %v186 = vpop.permute.xlu0 %185
    %v187 = vlaneseq
    %v188 = vshrl.u32 %v187, 7
    %v189 = vsub.s32 6, %v188
    %v190 = vrot.slane %v116, %v189
    %192 = vbcast.lane.b32.xlu0 %v190, 256
    %v193 = vpop.permute.xlu0 %192
    %s195 = sor.u32 256, 8
    %196 = vbcast.lane.b32.xlu0 %v190, %s195
    %v197 = vpop.permute.xlu0 %196
    %v198 = vlaneseq
    %v199 = vshrl.u32 %v198, 7
    %v200 = vsub.s32 7, %v199
    %v201 = vrot.slane %v116, %v200
    %203 = vbcast.lane.b32.xlu0 %v201, 256
    %v204 = vpop.permute.xlu0 %203
    %s206 = sor.u32 256, 8
    %207 = vbcast.lane.b32.xlu0 %v201, %s206
    %v208 = vpop.permute.xlu0 %207
    %v209 = vsub.f32 %v127, %v117
    %v210 = vsub.f32 %v131, %v118
    %v211 = vsub.f32 %v138, %v117
    %v212 = vsub.f32 %v142, %v118
    %v213 = vsub.f32 %v149, %v117
    %v214 = vsub.f32 %v153, %v118
    %v215 = vsub.f32 %v160, %v117
    %v216 = vsub.f32 %v164, %v118
    %v217 = vsub.f32 %v171, %v117
    %v218 = vsub.f32 %v175, %v118
    %v219 = vsub.f32 %v182, %v117
    %v220 = vsub.f32 %v186, %v118
    %v221 = vsub.f32 %v193, %v117
    %v222 = vsub.f32 %v197, %v118
    %v223 = vsub.f32 %v204, %v117
    %v224 = vsub.f32 %v208, %v118
    %v225 = vmul.f32 %v209, %v209
    %v226 = vmul.f32 %v210, %v210
    %v227 = vmul.f32 %v211, %v211
    %v228 = vmul.f32 %v212, %v212
    %v229 = vmul.f32 %v213, %v213
    %v230 = vmul.f32 %v214, %v214
    %v231 = vmul.f32 %v215, %v215
    %v232 = vmul.f32 %v216, %v216
    %v233 = vmul.f32 %v217, %v217
    %v234 = vmul.f32 %v218, %v218
    %v235 = vmul.f32 %v219, %v219
    %v236 = vmul.f32 %v220, %v220
    %v237 = vmul.f32 %v221, %v221
    %v238 = vmul.f32 %v222, %v222
    %v239 = vmul.f32 %v223, %v223
    %v240 = vmul.f32 %v224, %v224
    %v241 = vmul.f32 %v225, %v119
    %v242 = vmul.f32 %v226, %v120
    %v243 = vmul.f32 %v227, %v119
    %v244 = vmul.f32 %v228, %v120
    %v245 = vmul.f32 %v229, %v119
    %v246 = vmul.f32 %v230, %v120
    %v247 = vmul.f32 %v231, %v119
    %v248 = vmul.f32 %v232, %v120
    %v249 = vmul.f32 %v233, %v119
    %v250 = vmul.f32 %v234, %v120
    %v251 = vmul.f32 %v235, %v119
    %v252 = vmul.f32 %v236, %v120
    %v253 = vmul.f32 %v237, %v119
    %v254 = vmul.f32 %v238, %v120
    %v255 = vmul.f32 %v239, %v119
    %v256 = vmul.f32 %v240, %v120
    %v257 = vmul.f32 %v241, 1.442695
    %v258 = vpow.pop %v257
    %v259 = vmul.f32 %v242, 1.442695
    %v260 = vpow.pop %v259
    %v261 = vmul.f32 %v243, 1.442695
    %v262 = vpow.pop %v261
    %v263 = vmul.f32 %v244, 1.442695
    %v264 = vpow.pop %v263
    %v265 = vmul.f32 %v245, 1.442695
    %v266 = vpow.pop %v265
    %v267 = vmul.f32 %v246, 1.442695
    %v268 = vpow.pop %v267
    %v269 = vmul.f32 %v247, 1.442695
    %v270 = vpow.pop %v269
    %v271 = vmul.f32 %v248, 1.442695
    %v272 = vpow.pop %v271
    %v273 = vmul.f32 %v249, 1.442695
    %v274 = vpow.pop %v273
    %v275 = vmul.f32 %v250, 1.442695
    %v276 = vpow.pop %v275
    %v277 = vmul.f32 %v251, 1.442695
    %v278 = vpow.pop %v277
    %v279 = vmul.f32 %v252, 1.442695
    %v280 = vpow.pop %v279
    %v281 = vmul.f32 %v253, 1.442695
    %v282 = vpow.pop %v281
    %v283 = vmul.f32 %v254, 1.442695
    %v284 = vpow.pop %v283
    %v285 = vmul.f32 %v255, 1.442695
    %v286 = vpow.pop %v285
    %v287 = vmul.f32 %v256, 1.442695
    %v288 = vpow.pop %v287
    %v289 = vadd.f32 %v258, 1e-06
    %v290 = vadd.f32 %v260, 1e-06
    %v291 = vadd.f32 %v262, 1e-06
    %v292 = vadd.f32 %v264, 1e-06
    %v293 = vadd.f32 %v266, 1e-06
    %v294 = vadd.f32 %v268, 1e-06
    %v295 = vadd.f32 %v270, 1e-06
    %v296 = vadd.f32 %v272, 1e-06
    %v297 = vadd.f32 %v274, 1e-06
    %v298 = vadd.f32 %v276, 1e-06
    %v299 = vadd.f32 %v278, 1e-06
    %v300 = vadd.f32 %v280, 1e-06
    %v301 = vadd.f32 %v282, 1e-06
    %v302 = vadd.f32 %v284, 1e-06
    %v303 = vadd.f32 %v286, 1e-06
    %v304 = vadd.f32 %v288, 1e-06
    %v305 = vlog2.pop %v289
    %v306 = vmul.f32 %v305, 0.6931472
    %v307 = vlog2.pop %v290
    %v308 = vmul.f32 %v307, 0.6931472
    %v309 = vlog2.pop %v291
    %v310 = vmul.f32 %v309, 0.6931472
    %v311 = vlog2.pop %v292
    %v312 = vmul.f32 %v311, 0.6931472
    %v313 = vlog2.pop %v293
    %v314 = vmul.f32 %v313, 0.6931472
    %v315 = vlog2.pop %v294
    %v316 = vmul.f32 %v315, 0.6931472
    %v317 = vlog2.pop %v295
    %v318 = vmul.f32 %v317, 0.6931472
    %v319 = vlog2.pop %v296
    %v320 = vmul.f32 %v319, 0.6931472
    %v321 = vlog2.pop %v297
    %v322 = vmul.f32 %v321, 0.6931472
    %v323 = vlog2.pop %v298
    %v324 = vmul.f32 %v323, 0.6931472
    %v325 = vlog2.pop %v299
    %v326 = vmul.f32 %v325, 0.6931472
    %v327 = vlog2.pop %v300
    %v328 = vmul.f32 %v327, 0.6931472
    %v329 = vlog2.pop %v301
    %v330 = vmul.f32 %v329, 0.6931472
    %v331 = vlog2.pop %v302
    %v332 = vmul.f32 %v331, 0.6931472
    %v333 = vlog2.pop %v303
    %v334 = vmul.f32 %v333, 0.6931472
    %v335 = vlog2.pop %v304
    %v336 = vmul.f32 %v335, 0.6931472
    %v337 = vadd.f32 %v306, %v308
    %v338 = vrot.slane %v337, 4
    %v339 = vadd.f32 %v337, %v338
    %v340 = vrot.slane %v339, 2
    %v341 = vadd.f32 %v339, %v340
    %v342 = vrot.slane %v341, 1
    %v343 = vadd.f32 %v341, %v342
    %v344 = vadd.f32 %v310, %v312
    %v345 = vrot.slane %v344, 4
    %v346 = vadd.f32 %v344, %v345
    %v347 = vrot.slane %v346, 2
    %v348 = vadd.f32 %v346, %v347
    %v349 = vrot.slane %v348, 1
    %v350 = vadd.f32 %v348, %v349
    %v351 = vadd.f32 %v314, %v316
    %v352 = vrot.slane %v351, 4
    %v353 = vadd.f32 %v351, %v352
    %v354 = vrot.slane %v353, 2
    %v355 = vadd.f32 %v353, %v354
    %v356 = vrot.slane %v355, 1
    %v357 = vadd.f32 %v355, %v356
    %v358 = vadd.f32 %v318, %v320
    %v359 = vrot.slane %v358, 4
    %v360 = vadd.f32 %v358, %v359
    %v361 = vrot.slane %v360, 2
    %v362 = vadd.f32 %v360, %v361
    %v363 = vrot.slane %v362, 1
    %v364 = vadd.f32 %v362, %v363
    %v365 = vadd.f32 %v322, %v324
    %v366 = vrot.slane %v365, 4
    %v367 = vadd.f32 %v365, %v366
    %v368 = vrot.slane %v367, 2
    %v369 = vadd.f32 %v367, %v368
    %v370 = vrot.slane %v369, 1
    %v371 = vadd.f32 %v369, %v370
    %v372 = vadd.f32 %v326, %v328
    %v373 = vrot.slane %v372, 4
    %v374 = vadd.f32 %v372, %v373
    %v375 = vrot.slane %v374, 2
    %v376 = vadd.f32 %v374, %v375
    %v377 = vrot.slane %v376, 1
    %v378 = vadd.f32 %v376, %v377
    %v379 = vadd.f32 %v330, %v332
    %v380 = vrot.slane %v379, 4
    %v381 = vadd.f32 %v379, %v380
    %v382 = vrot.slane %v381, 2
    %v383 = vadd.f32 %v381, %v382
    %v384 = vrot.slane %v383, 1
    %v385 = vadd.f32 %v383, %v384
    %v386 = vadd.f32 %v334, %v336
    %v387 = vrot.slane %v386, 4
    %v388 = vadd.f32 %v386, %v387
    %v389 = vrot.slane %v388, 2
    %v390 = vadd.f32 %v388, %v389
    %v391 = vrot.slane %v390, 1
    %v392 = vadd.f32 %v390, %v391
    %v393 = vld [vmem:[#allocation8] sm:$0x1]
    %v395 = vlaneseq
    %v396 = vshrl.u32 %v395, 7
    %v397 = vsub.s32 0, %v396
    %v398 = vrot.slane %v393, %v397
    %v400 = vadd.f32 %v343, %v398
    %v401 = vadd.f32 %v350, %v398
    %v402 = vadd.f32 %v357, %v398
    %v403 = vadd.f32 %v364, %v398
    %v404 = vadd.f32 %v371, %v398
    %v405 = vadd.f32 %v378, %v398
    %v406 = vadd.f32 %v385, %v398
    %v407 = vadd.f32 %v392, %v398
    %v416 = vrot.slane %v401, 7
    %vm417 = vcmask 1041409
    %v418 = vsel %vm417, %v416, %v400
    %v419 = vrot.slane %v402, 6
    %vm420 = vcmask 1042434
    %v421 = vsel %vm420, %v419, %v418
    %v422 = vrot.slane %v403, 5
    %vm423 = vcmask 1043459
    %v424 = vsel %vm423, %v422, %v421
    %v425 = vrot.slane %v404, 4
    %vm426 = vcmask 1044484
    %v427 = vsel %vm426, %v425, %v424
    %v428 = vrot.slane %v405, 3
    %vm429 = vcmask 1045509
    %v430 = vsel %vm429, %v428, %v427
    %v431 = vrot.slane %v406, 2
    %vm432 = vcmask 1046534
    %v433 = vsel %vm432, %v431, %v430
    %v434 = vrot.slane %v407, 1
    %vm435 = vcmask 1047559
    %v436 = vsel %vm435, %v434, %v433
    %438 = vmax.xlane.f32.xlu0 %v436
    %v439 = vpop.xlane.xlu0 %438
    %v441 = vrot.slane %v439, 1
    %v442 = vrot.slane %v439, 2
    %v443 = vrot.slane %v439, 3
    %v444 = vrot.slane %v439, 4
    %v445 = vrot.slane %v439, 5
    %v446 = vrot.slane %v439, 6
    %v447 = vrot.slane %v439, 7
    %v456 = vsub.f32 %v400, %v439
    %v457 = vsub.f32 %v401, %v441
    %v458 = vsub.f32 %v402, %v442
    %v459 = vsub.f32 %v403, %v443
    %v460 = vsub.f32 %v404, %v444
    %v461 = vsub.f32 %v405, %v445
    %v462 = vsub.f32 %v406, %v446
    %v463 = vsub.f32 %v407, %v447
    %v464 = vmul.f32 %v456, 1.442695
    %v465 = vpow.pop %v464
    %v466 = vmul.f32 %v457, 1.442695
    %v467 = vpow.pop %v466
    %v468 = vmul.f32 %v458, 1.442695
    %v469 = vpow.pop %v468
    %v470 = vmul.f32 %v459, 1.442695
    %v471 = vpow.pop %v470
    %v472 = vmul.f32 %v460, 1.442695
    %v473 = vpow.pop %v472
    %v474 = vmul.f32 %v461, 1.442695
    %v475 = vpow.pop %v474
    %v476 = vmul.f32 %v462, 1.442695
    %v477 = vpow.pop %v476
    %v478 = vmul.f32 %v463, 1.442695
    %v479 = vpow.pop %v478
    %v488 = vrot.slane %v467, 7
    %v489 = vsel %vm417, %v488, %v465
    %v490 = vrot.slane %v469, 6
    %v491 = vsel %vm420, %v490, %v489
    %v492 = vrot.slane %v471, 5
    %v493 = vsel %vm423, %v492, %v491
    %v494 = vrot.slane %v473, 4
    %v495 = vsel %vm426, %v494, %v493
    %v496 = vrot.slane %v475, 3
    %v497 = vsel %vm429, %v496, %v495
    %v498 = vrot.slane %v477, 2
    %v499 = vsel %vm432, %v498, %v497
    %v500 = vrot.slane %v479, 1
    %v501 = vsel %vm435, %v500, %v499
    %503 = vadd.xlane.f32.xlu0 %v501
    %v504 = vpop.xlane.xlu0 %503
    %v505 = vrcp.pop %v504
    %v506 = vmul.f32 1.0, %v505
    %v508 = vrot.slane %v506, 1
    %v509 = vrot.slane %v506, 2
    %v510 = vrot.slane %v506, 3
    %v511 = vrot.slane %v506, 4
    %v512 = vrot.slane %v506, 5
    %v513 = vrot.slane %v506, 6
    %v514 = vrot.slane %v506, 7
    %v523 = vmul.f32 %v465, %v506
    %v524 = vmul.f32 %v467, %v508
    %v525 = vmul.f32 %v469, %v509
    %v526 = vmul.f32 %v471, %v510
    %v527 = vmul.f32 %v473, %v511
    %v528 = vmul.f32 %v475, %v512
    %v529 = vmul.f32 %v477, %v513
    %v530 = vmul.f32 %v479, %v514
    %v531 = vld [vmem:[#allocation10] sm:$0xff]
    %v532 = vld [vmem:[#allocation10 + $0x8] sm:$0xff]
    %v533 = vld [vmem:[#allocation10 + $0x10] sm:$0xff]
    %v534 = vld [vmem:[#allocation10 + $0x18] sm:$0xff]
    %v535 = vld [vmem:[#allocation10 + $0x20] sm:$0xff]
    %v536 = vld [vmem:[#allocation10 + $0x28] sm:$0xff]
    %v537 = vld [vmem:[#allocation11] sm:$0x7]
    %v539 = vlaneseq
    %v540 = vshrl.u32 %v539, 7
    %v541 = vsub.s32 0, %v540
    %v542 = vrot.slane %v537, %v541
    %v543 = vlaneseq
    %v544 = vshrl.u32 %v543, 7
    %v545 = vsub.s32 1, %v544
    %v546 = vrot.slane %v537, %v545
    %v547 = vlaneseq
    %v548 = vshrl.u32 %v547, 7
    %v549 = vsub.s32 2, %v548
    %v550 = vrot.slane %v537, %v549
    %vm554 = vcmask 130048
    %v556 = vsel %vm554, %v116, 0
    %558 = vmatprep.subr.mxu0 %v532
    %559 = vmatpush1.msra.mxu0 %v531
    %560 = vmatprep.subr.mxu0 %v535
    %561 = vmatpush1.msra.mxu0 %v534
    %562 = vmatprep.subr.mxu0 0.0
    %563 = vmatpush1.msra.mxu0 0.0
    %564 = vmatprep.subr.mxu0 0.0
    %565 = vmatpush1.msra.mxu0 0.0
    %566 = vmatprep.subr.mxu0 0.0
    %567 = vmatpush1.msra.mxu0 0.0
    %568 = vmatprep.subr.mxu0 0.0
    %569 = vmatpush1.msra.mxu0 0.0
    %570 = vmatprep.subr.mxu0 0.0
    %571 = vmatpush1.msra.mxu0 0.0
    %572 = vmatprep.subr.mxu0 0.0
    %573 = vmatpush1.msra.mxu0 0.0
    %574 = vmatprep.subr.mxu0 0.0
    %575 = vmatpush1.msra.mxu0 0.0
    %576 = vmatprep.subr.mxu0 0.0
    %577 = vmatpush1.msra.mxu0 0.0
    %578 = vmatprep.subr.mxu0 0.0
    %579 = vmatpush1.msra.mxu0 0.0
    %580 = vmatprep.subr.mxu0 0.0
    %581 = vmatpush1.msra.mxu0 0.0
    %582 = vmatprep.subr.mxu0 0.0
    %583 = vmatpush1.msra.mxu0 0.0
    %584 = vmatprep.subr.mxu0 0.0
    %585 = vmatpush1.msra.mxu0 0.0
    %586 = vmatprep.subr.mxu0 0.0
    %587 = vmatpush1.msra.mxu0 0.0
    %588 = vmatprep.subr.mxu0 0.0
    %589 = vmatpush1.msra.mxu0 0.0
    %590 = vmatprep.subr.mxu0 0.0
    %591 = vmatpush1.msra.mxu0 0.0
    %592 = vmatprep.subr.mxu0 0.0
    %593 = vmatpush1.msra.mxu0 0.0
    %594 = vmatprep.subr.mxu0 0.0
    %595 = vmatpush1.msra.mxu0 0.0
    %596 = vmatprep.subr.mxu0 0.0
    %597 = vmatpush1.msra.mxu0 0.0
    %598 = vmatprep.subr.mxu0 0.0
    %599 = vmatpush1.msra.mxu0 0.0
    %600 = vmatprep.subr.mxu0 0.0
    %601 = vmatpush1.msra.mxu0 0.0
    %602 = vmatprep.subr.mxu0 0.0
    %603 = vmatpush1.msra.mxu0 0.0
    %604 = vmatprep.subr.mxu0 0.0
    %605 = vmatpush1.msra.mxu0 0.0
    %606 = vmatprep.subr.mxu0 0.0
    %607 = vmatpush1.msra.mxu0 0.0
    %608 = vmatprep.subr.mxu0 0.0
    %609 = vmatpush1.msra.mxu0 0.0
    %610 = vmatprep.subr.mxu0 0.0
    %611 = vmatpush1.msra.mxu0 0.0
    %612 = vmatprep.subr.mxu0 0.0
    %613 = vmatpush1.msra.mxu0 0.0
    %614 = vmatprep.subr.mxu0 0.0
    %615 = vmatpush1.msra.mxu0 0.0
    %616 = vmatprep.subr.mxu0 0.0
    %617 = vmatpush1.msra.mxu0 0.0
    %618 = vmatprep.subr.mxu0 0.0
    %619 = vmatpush1.msra.mxu0 0.0
    %620 = vmatprep.subr.mxu0 0.0
    %621 = vmatpush1.msra.mxu0 0.0
    %622 = vmatprep.mubr.f32.mxu0 0.0
    %623 = vmatmul.mubr.f32.gmra.mrb[0].mxu0 %v556
    %v624 = vpop.f32.mrb[0].mxu0
    %v625 = vadd.f32 %v542, %v624
    %v626 = vpop.f32.mrb[0].mxu0
    %v627 = vadd.f32 %v546, %v626
    %628 = vdwg.mxu0
    %629 = vmatprep.subr.mxu0 0.0
    %630 = vmatpush1.msra.mxu0 %v533
    %631 = vmatprep.subr.mxu0 0.0
    %632 = vmatpush1.msra.mxu0 %v536
    %633 = vmatprep.subr.mxu0 0.0
    %634 = vmatpush1.msra.mxu0 0.0
    %635 = vmatprep.subr.mxu0 0.0
    %636 = vmatpush1.msra.mxu0 0.0
    %637 = vmatprep.subr.mxu0 0.0
    %638 = vmatpush1.msra.mxu0 0.0
    %639 = vmatprep.subr.mxu0 0.0
    %640 = vmatpush1.msra.mxu0 0.0
    %641 = vmatprep.subr.mxu0 0.0
    %642 = vmatpush1.msra.mxu0 0.0
    %643 = vmatprep.subr.mxu0 0.0
    %644 = vmatpush1.msra.mxu0 0.0
    %645 = vmatprep.subr.mxu0 0.0
    %646 = vmatpush1.msra.mxu0 0.0
    %647 = vmatprep.subr.mxu0 0.0
    %648 = vmatpush1.msra.mxu0 0.0
    %649 = vmatprep.subr.mxu0 0.0
    %650 = vmatpush1.msra.mxu0 0.0
    %651 = vmatprep.subr.mxu0 0.0
    %652 = vmatpush1.msra.mxu0 0.0
    %653 = vmatprep.subr.mxu0 0.0
    %654 = vmatpush1.msra.mxu0 0.0
    %655 = vmatprep.subr.mxu0 0.0
    %656 = vmatpush1.msra.mxu0 0.0
    %657 = vmatprep.subr.mxu0 0.0
    %658 = vmatpush1.msra.mxu0 0.0
    %659 = vmatprep.subr.mxu0 0.0
    %660 = vmatpush1.msra.mxu0 0.0
    %661 = vmatprep.subr.mxu0 0.0
    %662 = vmatpush1.msra.mxu0 0.0
    %663 = vmatprep.subr.mxu0 0.0
    %664 = vmatpush1.msra.mxu0 0.0
    %665 = vmatprep.subr.mxu0 0.0
    %666 = vmatpush1.msra.mxu0 0.0
    %667 = vmatprep.subr.mxu0 0.0
    %668 = vmatpush1.msra.mxu0 0.0
    %669 = vmatprep.subr.mxu0 0.0
    %670 = vmatpush1.msra.mxu0 0.0
    %671 = vmatprep.subr.mxu0 0.0
    %672 = vmatpush1.msra.mxu0 0.0
    %673 = vmatprep.subr.mxu0 0.0
    %674 = vmatpush1.msra.mxu0 0.0
    %675 = vmatprep.subr.mxu0 0.0
    %676 = vmatpush1.msra.mxu0 0.0
    %677 = vmatprep.subr.mxu0 0.0
    %678 = vmatpush1.msra.mxu0 0.0
    %679 = vmatprep.subr.mxu0 0.0
    %680 = vmatpush1.msra.mxu0 0.0
    %681 = vmatprep.subr.mxu0 0.0
    %682 = vmatpush1.msra.mxu0 0.0
    %683 = vmatprep.subr.mxu0 0.0
    %684 = vmatpush1.msra.mxu0 0.0
    %685 = vmatprep.subr.mxu0 0.0
    %686 = vmatpush1.msra.mxu0 0.0
    %687 = vmatprep.subr.mxu0 0.0
    %688 = vmatpush1.msra.mxu0 0.0
    %689 = vmatprep.subr.mxu0 0.0
    %690 = vmatpush1.msra.mxu0 0.0
    %691 = vmatprep.subr.mxu0 0.0
    %692 = vmatpush1.msra.mxu0 0.0
    %693 = vmatprep.mubr.f32.mxu0 0.0
    %694 = vmatmul.mubr.f32.gmra.mrb[0].mxu0 %v556
    %v695 = vpop.f32.mrb[0].mxu0
    %v696 = vadd.f32 %v550, %v695
    %v697 = vpop.f32.mrb[0].mxu0
    %698 = vdwg.mxu0
    %v707 = vrot.slane %v524, 7
    %v708 = vsel %vm417, %v707, %v523
    %v709 = vrot.slane %v525, 6
    %v710 = vsel %vm420, %v709, %v708
    %v711 = vrot.slane %v526, 5
    %v712 = vsel %vm423, %v711, %v710
    %v713 = vrot.slane %v527, 4
    %v714 = vsel %vm426, %v713, %v712
    %v715 = vrot.slane %v528, 3
    %v716 = vsel %vm429, %v715, %v714
    %v717 = vrot.slane %v529, 2
    %v718 = vsel %vm432, %v717, %v716
    %v719 = vrot.slane %v530, 1
    %v720 = vsel %vm435, %v719, %v718
    %v722 = vmul.f32 %v720, %v625
    %v723 = vmul.f32 %v720, %v627
    %v724 = vmul.f32 %v720, %v696
    %v725 = vld [vmem:[#allocation13] sm:$0xff]
    %v726 = vld [vmem:[#allocation13 + $0x8] sm:$0xff]
    %v727 = vld [vmem:[#allocation13 + $0x10] sm:$0xff]
    %v728 = vld [vmem:[#allocation13 + $0x18] sm:$0xff]
    %v729 = vld [vmem:[#allocation13 + $0x20] sm:$0xff]
    %v730 = vld [vmem:[#allocation13 + $0x28] sm:$0xff]
    %v731 = vld [vmem:[#allocation13 + $0x30] sm:$0xff]
    %v732 = vld [vmem:[#allocation13 + $0x38] sm:$0xff]
    %v733 = vld [vmem:[#allocation13 + $0x40] sm:$0xff]
    %v734 = vld [vmem:[#allocation13 + $0x48] sm:$0xff]
    %v735 = vld [vmem:[#allocation13 + $0x50] sm:$0xff]
    %v736 = vld [vmem:[#allocation13 + $0x58] sm:$0xff]
    %v737 = vld [vmem:[#allocation13 + $0x60] sm:$0xff]
    %v738 = vld [vmem:[#allocation13 + $0x68] sm:$0xff]
    %v739 = vld [vmem:[#allocation13 + $0x70] sm:$0xff]
    %v740 = vld [vmem:[#allocation13 + $0x78] sm:$0xff]
    %v741 = vld [vmem:[#allocation13 + $0x80] sm:$0xff]
    %v742 = vld [vmem:[#allocation13 + $0x88] sm:$0xff]
    %v743 = vld [vmem:[#allocation13 + $0x90] sm:$0xff]
    %v744 = vld [vmem:[#allocation13 + $0x98] sm:$0xff]
    %v745 = vld [vmem:[#allocation13 + $0xa0] sm:$0xff]
    %v746 = vld [vmem:[#allocation13 + $0xa8] sm:$0xff]
    %v747 = vld [vmem:[#allocation13 + $0xb0] sm:$0xff]
    %v748 = vld [vmem:[#allocation13 + $0xb8] sm:$0xff]
    %v749 = vld [vmem:[#allocation13 + $0xc0] sm:$0xff]
    %v750 = vld [vmem:[#allocation13 + $0xc8] sm:$0xff]
    %v751 = vld [vmem:[#allocation13 + $0xd0] sm:$0xff]
    %v752 = vld [vmem:[#allocation13 + $0xd8] sm:$0xff]
    %v753 = vld [vmem:[#allocation13 + $0xe0] sm:$0xff]
    %v754 = vld [vmem:[#allocation13 + $0xe8] sm:$0xff]
    %v755 = vld [vmem:[#allocation13 + $0xf0] sm:$0xff]
    %v756 = vld [vmem:[#allocation13 + $0xf8] sm:$0xff]
    %v757 = vld [vmem:[#allocation13 + $0x100] sm:$0xff]
    %v758 = vld [vmem:[#allocation13 + $0x108] sm:$0xff]
    %v759 = vld [vmem:[#allocation13 + $0x110] sm:$0xff]
    %v760 = vld [vmem:[#allocation13 + $0x118] sm:$0xff]
    %v761 = vld [vmem:[#allocation13 + $0x120] sm:$0xff]
    %v762 = vld [vmem:[#allocation13 + $0x128] sm:$0xff]
    %v763 = vld [vmem:[#allocation13 + $0x130] sm:$0xff]
    %v764 = vld [vmem:[#allocation13 + $0x138] sm:$0xff]
    %v765 = vld [vmem:[#allocation13 + $0x140] sm:$0xff]
    %v766 = vld [vmem:[#allocation13 + $0x148] sm:$0xff]
    %v767 = vld [vmem:[#allocation13 + $0x150] sm:$0xff]
    %v768 = vld [vmem:[#allocation13 + $0x158] sm:$0xff]
    %v769 = vld [vmem:[#allocation13 + $0x160] sm:$0xff]
    %v770 = vld [vmem:[#allocation13 + $0x168] sm:$0xff]
    %v771 = vld [vmem:[#allocation13 + $0x170] sm:$0xff]
    %v772 = vld [vmem:[#allocation13 + $0x178] sm:$0xff]
    %773 = vmatprep.subr.mxu0 0.0
    %774 = vmatpush1.msra.mxu0 %v725
    %775 = vmatprep.subr.mxu0 0.0
    %776 = vmatpush1.msra.mxu0 %v726
    %777 = vmatprep.subr.mxu0 0.0
    %778 = vmatpush1.msra.mxu0 %v727
    %779 = vmatprep.subr.mxu0 0.0
    %780 = vmatpush1.msra.mxu0 %v728
    %781 = vmatprep.subr.mxu0 0.0
    %782 = vmatpush1.msra.mxu0 %v729
    %783 = vmatprep.subr.mxu0 0.0
    %784 = vmatpush1.msra.mxu0 %v730
    %785 = vmatprep.subr.mxu0 0.0
    %786 = vmatpush1.msra.mxu0 %v731
    %787 = vmatprep.subr.mxu0 0.0
    %788 = vmatpush1.msra.mxu0 %v732
    %789 = vmatprep.subr.mxu0 0.0
    %790 = vmatpush1.msra.mxu0 %v733
    %791 = vmatprep.subr.mxu0 0.0
    %792 = vmatpush1.msra.mxu0 %v734
    %793 = vmatprep.subr.mxu0 0.0
    %794 = vmatpush1.msra.mxu0 %v735
    %795 = vmatprep.subr.mxu0 0.0
    %796 = vmatpush1.msra.mxu0 %v736
    %797 = vmatprep.subr.mxu0 0.0
    %798 = vmatpush1.msra.mxu0 %v737
    %799 = vmatprep.subr.mxu0 0.0
    %800 = vmatpush1.msra.mxu0 %v738
    %801 = vmatprep.subr.mxu0 0.0
    %802 = vmatpush1.msra.mxu0 %v739
    %803 = vmatprep.subr.mxu0 0.0
    %804 = vmatpush1.msra.mxu0 %v740
    %805 = vmatprep.subr.mxu0 0.0
    %806 = vmatpush1.msra.mxu0 %v741
    %807 = vmatprep.subr.mxu0 0.0
    %808 = vmatpush1.msra.mxu0 %v742
    %809 = vmatprep.subr.mxu0 0.0
    %810 = vmatpush1.msra.mxu0 %v743
    %811 = vmatprep.subr.mxu0 0.0
    %812 = vmatpush1.msra.mxu0 %v744
    %813 = vmatprep.subr.mxu0 0.0
    %814 = vmatpush1.msra.mxu0 %v745
    %815 = vmatprep.subr.mxu0 0.0
    %816 = vmatpush1.msra.mxu0 %v746
    %817 = vmatprep.subr.mxu0 0.0
    %818 = vmatpush1.msra.mxu0 %v747
    %819 = vmatprep.subr.mxu0 0.0
    %820 = vmatpush1.msra.mxu0 %v748
    %821 = vmatprep.subr.mxu0 0.0
    %822 = vmatpush1.msra.mxu0 %v749
    %823 = vmatprep.subr.mxu0 0.0
    %824 = vmatpush1.msra.mxu0 %v750
    %825 = vmatprep.subr.mxu0 0.0
    %826 = vmatpush1.msra.mxu0 %v751
    %827 = vmatprep.subr.mxu0 0.0
    %828 = vmatpush1.msra.mxu0 %v752
    %829 = vmatprep.subr.mxu0 0.0
    %830 = vmatpush1.msra.mxu0 %v753
    %831 = vmatprep.subr.mxu0 0.0
    %832 = vmatpush1.msra.mxu0 %v754
    %833 = vmatprep.subr.mxu0 0.0
    %834 = vmatpush1.msra.mxu0 %v755
    %835 = vmatprep.subr.mxu0 0.0
    %836 = vmatpush1.msra.mxu0 %v756
    %837 = vmatprep.mubr.f32.mxu0 %v723
    %838 = vmatmul.mubr.f32.gmra.mrb[0].mxu0 %v722
    %v839 = vpop.f32.mrb[0].mxu0
    %v840 = vadd.f32 0.0, %v839
    %v841 = vpop.f32.mrb[0].mxu0
    %842 = vdwg.mxu0
    %843 = vmatprep.subr.mxu0 0.0
    %844 = vmatpush1.msra.mxu0 %v757
    %845 = vmatprep.subr.mxu0 0.0
    %846 = vmatpush1.msra.mxu0 %v758
    %847 = vmatprep.subr.mxu0 0.0
    %848 = vmatpush1.msra.mxu0 %v759
    %849 = vmatprep.subr.mxu0 0.0
    %850 = vmatpush1.msra.mxu0 %v760
    %851 = vmatprep.subr.mxu0 0.0
    %852 = vmatpush1.msra.mxu0 %v761
    %853 = vmatprep.subr.mxu0 0.0
    %854 = vmatpush1.msra.mxu0 %v762
    %855 = vmatprep.subr.mxu0 0.0
    %856 = vmatpush1.msra.mxu0 %v763
    %857 = vmatprep.subr.mxu0 0.0
    %858 = vmatpush1.msra.mxu0 %v764
    %859 = vmatprep.subr.mxu0 0.0
    %860 = vmatpush1.msra.mxu0 %v765
    %861 = vmatprep.subr.mxu0 0.0
    %862 = vmatpush1.msra.mxu0 %v766
    %863 = vmatprep.subr.mxu0 0.0
    %864 = vmatpush1.msra.mxu0 %v767
    %865 = vmatprep.subr.mxu0 0.0
    %866 = vmatpush1.msra.mxu0 %v768
    %867 = vmatprep.subr.mxu0 0.0
    %868 = vmatpush1.msra.mxu0 %v769
    %869 = vmatprep.subr.mxu0 0.0
    %870 = vmatpush1.msra.mxu0 %v770
    %871 = vmatprep.subr.mxu0 0.0
    %872 = vmatpush1.msra.mxu0 %v771
    %873 = vmatprep.subr.mxu0 0.0
    %874 = vmatpush1.msra.mxu0 %v772
    %875 = vmatprep.subr.mxu0 0.0
    %876 = vmatpush1.msra.mxu0 0.0
    %877 = vmatprep.subr.mxu0 0.0
    %878 = vmatpush1.msra.mxu0 0.0
    %879 = vmatprep.subr.mxu0 0.0
    %880 = vmatpush1.msra.mxu0 0.0
    %881 = vmatprep.subr.mxu0 0.0
    %882 = vmatpush1.msra.mxu0 0.0
    %883 = vmatprep.subr.mxu0 0.0
    %884 = vmatpush1.msra.mxu0 0.0
    %885 = vmatprep.subr.mxu0 0.0
    %886 = vmatpush1.msra.mxu0 0.0
    %887 = vmatprep.subr.mxu0 0.0
    %888 = vmatpush1.msra.mxu0 0.0
    %889 = vmatprep.subr.mxu0 0.0
    %890 = vmatpush1.msra.mxu0 0.0
    %891 = vmatprep.subr.mxu0 0.0
    %892 = vmatpush1.msra.mxu0 0.0
    %893 = vmatprep.subr.mxu0 0.0
    %894 = vmatpush1.msra.mxu0 0.0
    %895 = vmatprep.subr.mxu0 0.0
    %896 = vmatpush1.msra.mxu0 0.0
    %897 = vmatprep.subr.mxu0 0.0
    %898 = vmatpush1.msra.mxu0 0.0
    %899 = vmatprep.subr.mxu0 0.0
    %900 = vmatpush1.msra.mxu0 0.0
    %901 = vmatprep.subr.mxu0 0.0
    %902 = vmatpush1.msra.mxu0 0.0
    %903 = vmatprep.subr.mxu0 0.0
    %904 = vmatpush1.msra.mxu0 0.0
    %905 = vmatprep.subr.mxu0 0.0
    %906 = vmatpush1.msra.mxu0 0.0
    %907 = vmatprep.mubr.f32.mxu0 0.0
    %908 = vmatmul.mubr.f32.gmra.mrb[0].mxu0 %v724
    %v909 = vpop.f32.mrb[0].mxu0
    %v910 = vadd.f32 %v840, %v909
    %v911 = vpop.f32.mrb[0].mxu0
    %912 = vdwg.mxu0
    %vm913 = vcmask 23552
    %914 = vst.msk [vmem:[#allocation14] sm:$0xff] %vm913, %v910
    // Predicated region
    $region58: #{tpu_custom_call.1} parent=1 // pred_check
      _
    $region59: #{tpu_custom_call.1} parent=1 // pred_check_branch
      %916 = sbr.rel (0) target = $region61
    $region60: #{tpu_custom_call.1} parent=1 // pred_region
      %s918 = ssub.s32 128, 128
      %919 = vsyncadd [#allocation4], %s918
      %s921 = sshll.u32 [#allocation14], 4
      %s922 = int_to_ptr.vmem [resolvable:$true] %s921
      %924 = dma.vmem_to_hbm [thread:$0]  %s922, 128, %s7, [#allocation4]
    $region61: #{tpu_custom_call.1} parent=1 // pred_fallthru
      _
    // Predicated region
    $region62: #{tpu_custom_call.1} parent=1 // pred_check
      _
    $region63: #{tpu_custom_call.1} parent=1 // pred_check_branch
      %926 = sbr.rel (0) target = $region65
    $region64: #{tpu_custom_call.1} parent=1 // pred_region
      %927 = dma.done [#allocation4], 128
    $region65: #{tpu_custom_call.1} parent=1 // pred_fallthru
      _
    %928 = vsyncpa [#allocation3], 1
    %929 = vsyncpa [#allocation6], 1
    %930 = vsyncpa [#allocation9], 1
    %931 = vsyncpa [#allocation12], 1
    %932 = vsyncpa [#allocation4], 1

</llo_original>
